<compile_context>
chip_gen: v7x
topology: tpu7x:2x2x1
jax: 0.10.0
libtpu: 0.0.40
codegen_flags: <defaults>
</compile_context>

<pallas_src>
import functools

import jax
import jax.numpy as jnp
from jax import lax
from jax.experimental import pallas as pl
from jax.experimental.pallas import tpu as pltpu

_LANE = 128
_TARGET_BLOCK_BYTES = 2 << 20   # ~2 MiB of input per grid step (roofline plateau)
_MIN_GRID_STEPS = 8             # keep pipelining + both TCs busy on v7x
_PER_TC_VMEM = 64 << 20         # v7x per-TensorCore VMEM (smallest generation)
_VMEM_HEADROOM = 16 << 20       # Mosaic internal scratch / semaphores
_F32_TEMPS = 4                  # full-tile f32 temporaries in the kernel body


def _layernorm_kernel(x_ref, g_ref, b_ref, o_ref, *, eps, hidden):
    """Normalize each row of a (block_rows, H_pad) tile over the last axis.

    `hidden` is the TRUE feature width; the tile may be lane-padded to a
    multiple of 128.  Padded lanes hold zeros and are masked out of the
    variance, so all statistics use the true H only.
    """
    x = x_ref[...].astype(jnp.float32)
    h_pad = x.shape[-1]
    inv_h = 1.0 / float(hidden)

    if h_pad != hidden:  # static branch: only emitted for lane-padded H
        lane = lax.broadcasted_iota(jnp.int32, x.shape, x.ndim - 1)
        mask = lane < hidden
        x = jnp.where(mask, x, 0.0)          # zero pads -> sum uses true H only

    mean = jnp.sum(x, axis=-1, keepdims=True) * inv_h
    xc = x - mean                            # reused for variance and y
    if h_pad != hidden:
        xc = jnp.where(mask, xc, 0.0)        # pads would otherwise add mean^2
    var = jnp.sum(xc * xc, axis=-1, keepdims=True) * inv_h
    inv_std = lax.rsqrt(var + eps)           # EUP slot; eps inside sqrt = ref
    y = xc * inv_std
    out = g_ref[...].astype(jnp.float32) * y + b_ref[...].astype(jnp.float32)
    o_ref[...] = out.astype(o_ref.dtype)


def _sublane_pack(dtype):
    itemsize = jnp.dtype(dtype).itemsize
    return {4: 8, 2: 16, 1: 32}.get(itemsize, 8)


def _pick_block_rows(rows, hidden_padded, dtype):
    """Row tile: ~2 MiB of input, sublane-aligned, and >= ~8 grid steps."""
    pack = _sublane_pack(dtype)
    itemsize = jnp.dtype(dtype).itemsize
    bytes_per_row = max(1, hidden_padded * itemsize)

    by_bytes = max(pack, (_TARGET_BLOCK_BYTES // bytes_per_row) // pack * pack)

    rows_al = pl.cdiv(rows, pack) * pack
    by_steps = max(pack, (rows_al // _MIN_GRID_STEPS) // pack * pack)

    return max(pack, min(by_bytes, by_steps, rows_al))


def layer_norm(x, gamma, beta, *, eps=1e-5):
    """LayerNorm over the trailing `gamma.ndim` dims of x (PyTorch semantics)."""
    param_shape = gamma.shape
    norm_elems = 1
    for d in param_shape:
        norm_elems *= d
    lead_shape = x.shape[: x.ndim - len(param_shape)]

    rows = 1
    for d in lead_shape:
        rows *= d
    x2 = x.reshape(rows, norm_elems)
    g2 = gamma.reshape(1, norm_elems)
    b2 = beta.reshape(1, norm_elems)

    # Lane-density guard: pad H to a multiple of 128 so loads/stores are
    # unmasked full-lane ops.  The kernel masks the padded lanes and divides
    # by the TRUE H, so statistics are unchanged; padded output columns are
    # sliced off below.  Typical transformer widths are already aligned.
    h_pad = pl.cdiv(norm_elems, _LANE) * _LANE
    if h_pad != norm_elems:
        pad_cols = h_pad - norm_elems
        x2 = jnp.pad(x2, ((0, 0), (0, pad_cols)))
        g2 = jnp.pad(g2, ((0, 0), (0, pad_cols)))
        b2 = jnp.pad(b2, ((0, 0), (0, pad_cols)))

    itemsize = jnp.dtype(x.dtype).itemsize
    block_rows = _pick_block_rows(rows, h_pad, x.dtype)

    # Ragged rows: no padding.  The trailing block may be partial; Pallas
    # masks its out-of-range writeback, and any garbage in those unused tail
    # rows is never read by valid rows (rows are independent).
    grid_len = pl.cdiv(rows, block_rows)

    # VMEM accounting consistent with the block size: double-buffered input
    # and output in native dtype + ~4 full-tile f32 temporaries + params,
    # plus headroom; clamped to the v7x per-TensorCore budget.
    per_row = 4 * h_pad * itemsize + _F32_TEMPS * h_pad * 4
    resident = block_rows * per_row + 2 * h_pad * 4
    vmem_limit = int(
        max(32 << 20, min(resident + _VMEM_HEADROOM, _PER_TC_VMEM - _VMEM_HEADROOM))
    )

    cost = pl.CostEstimate(
        flops=8 * rows * norm_elems,
        transcendentals=rows,  # one rsqrt per row
        bytes_accessed=2 * rows * h_pad * itemsize
        + 2 * h_pad * jnp.dtype(gamma.dtype).itemsize,
    )

    out2 = pl.pallas_call(
        functools.partial(_layernorm_kernel, eps=eps, hidden=norm_elems),
        out_shape=jax.ShapeDtypeStruct((rows, h_pad), x.dtype),
        grid_spec=pltpu.PrefetchScalarGridSpec(
            num_scalar_prefetch=0,
            grid=(grid_len,),
            in_specs=[
                pl.BlockSpec((block_rows, h_pad), lambda i: (i, 0)),
                pl.BlockSpec((1, h_pad), lambda i: (0, 0)),
                pl.BlockSpec((1, h_pad), lambda i: (0, 0)),
            ],
            out_specs=pl.BlockSpec((block_rows, h_pad), lambda i: (i, 0)),
        ),
        compiler_params=pltpu.CompilerParams(
            dimension_semantics=("parallel",),
            vmem_limit_bytes=vmem_limit,
        ),
        cost_estimate=cost,
    )(x2, g2, b2)

    if h_pad != norm_elems:
        out2 = out2[:, :norm_elems]
    return out2.reshape(x.shape)


def layer_norm_ref(x, gamma, beta, eps=1e-5):
    # Pure-JAX reference mirroring the PyTorch forward exactly.
    dims = tuple(range(x.ndim - gamma.ndim, x.ndim))
    mean = jnp.mean(x, axis=dims, keepdims=True)
    var = jnp.mean((x - mean) ** 2, axis=dims, keepdims=True)
    std = jnp.sqrt(var + eps)
    y = (x - mean) / std
    return gamma * y + beta


if __name__ == "__main__":
    batch, seq, hidden = 2, 8, 32
    parameter_shape = (hidden,)
    eps = 1e-5

    key = jax.random.PRNGKey(0)
    x = jax.random.normal(key, (batch, seq, hidden), dtype=jnp.float32)

    # Deterministic init per the module's __init__: gamma = ones, beta = zeros.
    gamma = jnp.ones(parameter_shape, dtype=jnp.float32)
    beta = jnp.zeros(parameter_shape, dtype=jnp.float32)

    out = layer_norm(x, gamma, beta, eps=eps)
    out = jax.block_until_ready(out)

    ref = layer_norm_ref(x, gamma, beta, eps=eps)
    assert out.shape == x.shape and out.dtype == x.dtype
    assert jnp.allclose(out, ref, atol=1e-5, rtol=1e-5), "mismatch vs reference"

    print("KERNEL_OK")
</pallas_src>

<mosaic_0001>
module attributes {stable_mosaic.version = 11 : i64} {
  func.func @_layernorm_kernel(%arg0: i32, %arg1: memref<8x128xf32, #tpu.memory_space<vmem>>, %arg2: memref<1x128xf32, #tpu.memory_space<vmem>>, %arg3: memref<1x128xf32, #tpu.memory_space<vmem>>, %arg4: memref<8x128xf32, #tpu.memory_space<vmem>>) attributes {dimension_semantics = [#tpu.dimension_semantics<parallel>], iteration_bounds = array<i64: 2>, scalar_prefetch = 0 : i64, scratch_operands = 0 : i64, tpu.core_type = #tpu.core_type<tc>, window_params = [{transform_indices = @transform_0, window_bounds = array<i64: 8, 128>}, {pipeline_mode = #tpu.pipeline_mode<synchronous>, transform_indices = @transform_1, window_bounds = array<i64: 1, 128>}, {pipeline_mode = #tpu.pipeline_mode<synchronous>, transform_indices = @transform_2, window_bounds = array<i64: 1, 128>}, {transform_indices = @transform_3, window_bounds = array<i64: 8, 128>}]} {
    %c0 = arith.constant 0 : index
    %c0_0 = arith.constant 0 : index
    %0 = vector.load %arg1[%c0, %c0_0] : memref<8x128xf32, #tpu.memory_space<vmem>>, vector<8x128xf32>
    %1 = tpu.iota {dimensions = array<i32: 1>} : vector<8x128xi32>
    %c32_i32 = arith.constant 32 : i32
    %2 = vector.broadcast %c32_i32 : i32 to vector<8x128xi32>
    %3 = arith.cmpi slt, %1, %2 : vector<8x128xi32>
    %cst = arith.constant 0.000000e+00 : f32
    %4 = vector.broadcast %cst : f32 to vector<8x128xf32>
    %5 = arith.select %3, %0, %4 : vector<8x128xi1>, vector<8x128xf32>
    %cst_1 = arith.constant dense<0.000000e+00> : vector<8xf32>
    %6 = vector.multi_reduction <add>, %5, %cst_1 [1] : vector<8x128xf32> to vector<8xf32>
    %7 = vector.shape_cast %6 : vector<8xf32> to vector<8x1xf32>
    %cst_2 = arith.constant 3.125000e-02 : f32
    %8 = vector.broadcast %cst_2 : f32 to vector<8x1xf32>
    %9 = arith.mulf %7, %8 : vector<8x1xf32>
    %10 = vector.broadcast %9 : vector<8x1xf32> to vector<8x128xf32>
    %11 = arith.subf %5, %10 : vector<8x128xf32>
    %cst_3 = arith.constant 0.000000e+00 : f32
    %12 = vector.broadcast %cst_3 : f32 to vector<8x128xf32>
    %13 = arith.select %3, %11, %12 : vector<8x128xi1>, vector<8x128xf32>
    %14 = arith.mulf %13, %13 : vector<8x128xf32>
    %cst_4 = arith.constant dense<0.000000e+00> : vector<8xf32>
    %15 = vector.multi_reduction <add>, %14, %cst_4 [1] : vector<8x128xf32> to vector<8xf32>
    %16 = vector.shape_cast %15 : vector<8xf32> to vector<8x1xf32>
    %cst_5 = arith.constant 3.125000e-02 : f32
    %17 = vector.broadcast %cst_5 : f32 to vector<8x1xf32>
    %18 = arith.mulf %16, %17 : vector<8x1xf32>
    %cst_6 = arith.constant 9.99999974E-6 : f32
    %19 = vector.broadcast %cst_6 : f32 to vector<8x1xf32>
    %20 = arith.addf %18, %19 : vector<8x1xf32>
    %21 = math.rsqrt %20 : vector<8x1xf32>
    %22 = vector.broadcast %21 : vector<8x1xf32> to vector<8x128xf32>
    %23 = arith.mulf %13, %22 : vector<8x128xf32>
    %c0_7 = arith.constant 0 : index
    %c0_8 = arith.constant 0 : index
    %24 = vector.load %arg2[%c0_7, %c0_8] : memref<1x128xf32, #tpu.memory_space<vmem>>, vector<1x128xf32>
    %25 = vector.broadcast %24 : vector<1x128xf32> to vector<8x128xf32>
    %26 = arith.mulf %25, %23 : vector<8x128xf32>
    %c0_9 = arith.constant 0 : index
    %c0_10 = arith.constant 0 : index
    %27 = vector.load %arg3[%c0_9, %c0_10] : memref<1x128xf32, #tpu.memory_space<vmem>>, vector<1x128xf32>
    %28 = vector.broadcast %27 : vector<1x128xf32> to vector<8x128xf32>
    %29 = arith.addf %26, %28 : vector<8x128xf32>
    %c0_11 = arith.constant 0 : index
    %c0_12 = arith.constant 0 : index
    %30 = vector.load %arg4[%c0_11, %c0_12] : memref<8x128xf32, #tpu.memory_space<vmem>>, vector<8x128xf32>
    tpu.vector_store %arg4[%c0_11, %c0_12], %29 {strides = array<i32>} : memref<8x128xf32, #tpu.memory_space<vmem>>, vector<8x128xf32>,
    return
  }
  func.func @transform_0(%arg0: i32) -> (i32, i32) {
    %c0_i32 = arith.constant 0 : i32
    %c0_i32_0 = arith.constant 0 : i32
    return %arg0, %c0_i32 : i32, i32
  }
  func.func @transform_1(%arg0: i32) -> (i32, i32) {
    %c0_i32 = arith.constant 0 : i32
    %c0_i32_0 = arith.constant 0 : i32
    %c0_i32_1 = arith.constant 0 : i32
    return %c0_i32, %c0_i32_0 : i32, i32
  }
  func.func @transform_2(%arg0: i32) -> (i32, i32) {
    %c0_i32 = arith.constant 0 : i32
    %c0_i32_0 = arith.constant 0 : i32
    %c0_i32_1 = arith.constant 0 : i32
    return %c0_i32, %c0_i32_0 : i32, i32
  }
  func.func @transform_3(%arg0: i32) -> (i32, i32) {
    %c0_i32 = arith.constant 0 : i32
    %c0_i32_0 = arith.constant 0 : i32
    return %arg0, %c0_i32 : i32, i32
  }
}

</mosaic_0001>

<llo_original>
// kernel: tpu_custom_call.1
$region0: #{tpu_custom_call.1}
  #allocation0 [shape = 'u32[]', space=smem, size = 0x4, offset = 0x4, fixed_abs, tag = 'smem constant byte address 0x4 - core index']
  #allocation1 [shape = 'u32[144,128]{1,0:T(1,128)}', space=vmem, size = 0x12000, scoped, tag = 'internal scratch']
  %s0 = inlined_call_operand.hbm [shape: f32[16,128], index: 0, kind: input, shape index: {}]
  %s1 = inlined_call_operand.vmem [shape: f32[1,128], index: 1, kind: input, shape index: {}]
  %s2 = inlined_call_operand.vmem [shape: f32[1,128], index: 2, kind: input, shape index: {}]
  %s3 = inlined_call_operand.hbm [shape: f32[16,128], index: 3, kind: output, shape index: {}]
  %s4 = sld [smem:[#allocation0]]
  $region49: #{tpu_custom_call.1} parent=0
    _
  %s6 = ssub.s32 1, %s4
  %s7 = scalar_select 0, %s6, %s4
  $region1: #{tpu_custom_call.1} parent=0
    #allocation2 [shape = 'u8[8192]{0}', space=vmem, size = 0x2000, scoped, tag = 'input window, operand 0']
    #allocation3 [shape = 's32[2]{0}', space=sflag, size = 0x8, scoped, tag = 'scoped memory for tpu_custom_call.1']
    #allocation4 [shape = 's32[2]{0}', space=sflag, size = 0x8, scoped, tag = 'scoped memory for tpu_custom_call.1']
    #allocation5 [shape = 'u8[8192]{0}', space=vmem, size = 0x2000, scoped, tag = 'output window, operand 0']
    %8 = vsyncpa [#allocation3], 0
    %s9 = scalar_lea.sflag [#allocation3], 1
    %10 = vsyncpa %s9, 0
    %11 = vsyncpa [#allocation4], 0
    %s12 = scalar_lea.sflag [#allocation4], 1
    %13 = vsyncpa %s12, 0
    loop: start=0, step=1, limit=4
    $region2: #{tpu_custom_call.1} parent=1 // loop_pre_header
      _
    $region3: #{tpu_custom_call.1} parent=1 // loop_header
      %s15 = sphi 0, %s19
      %p16 = scmp.ge.s32.totalorder %s15, 4
      %s25 = sphi 0, %s27
      %s28 = sphi 0, %s25
      %s29 = sphi 0, %s28
      %s45 = sphi 0, %s29
      %s49 = sphi 0, %s49
      %s51 = sphi 0, %s49
      %s52 = sphi 0, %s51
      %s66 = sphi 0, %s52
      %s70 = sphi 0, %s70
      %s72 = sphi 0, %s70
      %s73 = sphi 0, %s72
      %s87 = sphi 0, %s73
      %s93 = sphi 0, %s95
      %s96 = sphi 0, %s93
      %s97 = sphi 0, %s96
      %s113 = sphi 0, %s97
    $region4: #{tpu_custom_call.1} parent=1 // loop_header_branch
      %18 = sbr.rel (%p16) target = $region8
    $region5: #{tpu_custom_call.1} parent=1 // loop_body
      %s20 = ssub.s32 %s15, 1
      %s21 = ssub.s32 %s15, 2
      %s22 = sadd.s32 %s15, 1
      %s23 = ssub.s32 %s15, %s22
      %p24 = scmp.eq.s32.totalorder %s23, 0
      %s26 = sadd.s32 %s25, 1
      %s27 = scalar_select %p24, %s25, %s26
      %p30 = pneg %p24
      %p31 = scmp.eq.s32.totalorder %s15, 1
      %p32 = por %p30, %p31
      %p33 = scmp.ne.s32.totalorder %s25, %s28
      %p34 = scmp.eq.s32.totalorder %s15, 0
      %p35 = por %p33, %p34
      %p36 = scmp.ne.s32.totalorder %s25, %s28
      %p37 = scmp.eq.s32.totalorder %s20, 1
      %p38 = por %p36, %p37
      %p39 = scmp.ne.s32.totalorder %s28, %s29
      %p40 = scmp.eq.s32.totalorder %s20, 0
      %p41 = por %p39, %p40
      %p42 = scmp.ne.s32.totalorder %s28, %s29
      %p43 = scmp.eq.s32.totalorder %s21, 1
      %p44 = por %p42, %p43
      %p46 = scmp.ne.s32.totalorder %s29, %s45
      %p47 = scmp.eq.s32.totalorder %s21, 0
      %p48 = por %p46, %p47
      %s50 = sadd.s32 %s49, 1
      %p53 = scmp.eq.s32.totalorder %s15, 1
      %p54 = scmp.ne.s32.totalorder %s49, %s51
      %p55 = scmp.eq.s32.totalorder %s15, 0
      %p56 = por %p54, %p55
      %p57 = scmp.ne.s32.totalorder %s49, %s51
      %p58 = scmp.eq.s32.totalorder %s20, 1
      %p59 = por %p57, %p58
      %p60 = scmp.ne.s32.totalorder %s51, %s52
      %p61 = scmp.eq.s32.totalorder %s20, 0
      %p62 = por %p60, %p61
      %p63 = scmp.ne.s32.totalorder %s51, %s52
      %p64 = scmp.eq.s32.totalorder %s21, 1
      %p65 = por %p63, %p64
      %p67 = scmp.ne.s32.totalorder %s52, %s66
      %p68 = scmp.eq.s32.totalorder %s21, 0
      %p69 = por %p67, %p68
      %s71 = sadd.s32 %s70, 1
      %p74 = scmp.eq.s32.totalorder %s15, 1
      %p75 = scmp.ne.s32.totalorder %s70, %s72
      %p76 = scmp.eq.s32.totalorder %s15, 0
      %p77 = por %p75, %p76
      %p78 = scmp.ne.s32.totalorder %s70, %s72
      %p79 = scmp.eq.s32.totalorder %s20, 1
      %p80 = por %p78, %p79
      %p81 = scmp.ne.s32.totalorder %s72, %s73
      %p82 = scmp.eq.s32.totalorder %s20, 0
      %p83 = por %p81, %p82
      %p84 = scmp.ne.s32.totalorder %s72, %s73
      %p85 = scmp.eq.s32.totalorder %s21, 1
      %p86 = por %p84, %p85
      %p88 = scmp.ne.s32.totalorder %s73, %s87
      %p89 = scmp.eq.s32.totalorder %s21, 0
      %p90 = por %p88, %p89
      %s91 = ssub.s32 %s15, %s22
      %p92 = scmp.eq.s32.totalorder %s91, 0
      %s94 = sadd.s32 %s93, 1
      %s95 = scalar_select %p92, %s93, %s94
      %p98 = pneg %p92
      %p99 = scmp.eq.s32.totalorder %s15, 1
      %p100 = por %p98, %p99
      %p101 = scmp.ne.s32.totalorder %s93, %s96
      %p102 = scmp.eq.s32.totalorder %s15, 0
      %p103 = por %p101, %p102
      %p104 = scmp.ne.s32.totalorder %s93, %s96
      %p105 = scmp.eq.s32.totalorder %s20, 1
      %p106 = por %p104, %p105
      %p107 = scmp.ne.s32.totalorder %s96, %s97
      %p108 = scmp.eq.s32.totalorder %s20, 0
      %p109 = por %p107, %p108
      %p110 = scmp.ne.s32.totalorder %s96, %s97
      %p111 = scmp.eq.s32.totalorder %s21, 1
      %p112 = por %p110, %p111
      %p114 = scmp.ne.s32.totalorder %s97, %s113
      %p115 = scmp.eq.s32.totalorder %s21, 0
      %p116 = por %p114, %p115
      %p117 = scmp.le.s32.totalorder 1, %s15
      %p118 = scmp.lt.s32.totalorder %s15, 3
      %p119 = pnand %p117, %p118
      %p120 = pneg %p119
      // Predicated region
      $region9: #{tpu_custom_call.1} parent=5 // pred_check
        _
      $region10: #{tpu_custom_call.1} parent=5 // pred_check_branch
        %122 = sbr.rel (%p119) target = $region12
      $region11: #{tpu_custom_call.1} parent=5 // pred_region
        %s123 = ssub.s32 %s15, 1
        // Predicated region
        $region13: #{tpu_custom_call.1} parent=11 // pred_check
          %p124 = pneg %p62
        $region14: #{tpu_custom_call.1} parent=11 // pred_check_branch
          %126 = sbr.rel (%p124) target = $region16
        $region15: #{tpu_custom_call.1} parent=11 // pred_region
          _
        $region16: #{tpu_custom_call.1} parent=11 // pred_fallthru
          _
        // Predicated region
        $region17: #{tpu_custom_call.1} parent=11 // pred_check
          %p127 = pneg %p83
        $region18: #{tpu_custom_call.1} parent=11 // pred_check_branch
          %129 = sbr.rel (%p127) target = $region20
        $region19: #{tpu_custom_call.1} parent=11 // pred_region
          _
        $region20: #{tpu_custom_call.1} parent=11 // pred_fallthru
          _
      $region12: #{tpu_custom_call.1} parent=5 // pred_fallthru
        _
      %p130 = scmp.lt.s32.totalorder %s15, 2
      // Predicated region
      $region21: #{tpu_custom_call.1} parent=5 // pred_check
        %p131 = pneg %p130
      $region22: #{tpu_custom_call.1} parent=5 // pred_check_branch
        %133 = sbr.rel (%p131) target = $region24
      $region23: #{tpu_custom_call.1} parent=5 // pred_region
        // Predicated region
        $region25: #{tpu_custom_call.1} parent=23 // pred_check
          %p134 = pneg %p35
        $region26: #{tpu_custom_call.1} parent=23 // pred_check_branch
          %136 = sbr.rel (%p134) target = $region28
        $region27: #{tpu_custom_call.1} parent=23 // pred_region
          %s137 = sand.u32 %s25, 1
          %s138 = scalar_lea.sflag [#allocation3], %s137
          %s139 = sand.u32 %s25, 1
          %s140 = smul.addr %s139, 8
          %s141 = scalar_lea.vmem [#allocation2], %s140
          %s143 = ssub.s32 128, 128
          %144 = vsyncadd %s138, %s143
          %s145 = smul.addr %s15, 128
          %s146 = scalar_lea.hbm %s0, %s145
          %s148 = sshll.u32 %s141, 4
          %s149 = int_to_ptr.vmem [resolvable:$true] %s148
          %151 = dma.hbm_to_vmem [thread:$0]  %s146, 128, %s149, %s138
        $region28: #{tpu_custom_call.1} parent=23 // pred_fallthru
          _
      $region24: #{tpu_custom_call.1} parent=5 // pred_fallthru
        _
      %p152 = scmp.le.s32.totalorder 1, %s15
      %p153 = scmp.lt.s32.totalorder %s15, 3
      %p154 = pnand %p152, %p153
      %p155 = pneg %p154
      // Predicated region
      $region29: #{tpu_custom_call.1} parent=5 // pred_check
        _
      $region30: #{tpu_custom_call.1} parent=5 // pred_check_branch
        %157 = sbr.rel (%p154) target = $region32
      $region31: #{tpu_custom_call.1} parent=5 // pred_region
        %s158 = ssub.s32 %s15, 1
        %s159 = sand.u32 %s28, 1
        %s160 = scalar_lea.sflag [#allocation3], %s159
        %s161 = sand.u32 %s28, 1
        %s162 = smul.addr %s161, 8
        %s163 = scalar_lea.vmem [#allocation2], %s162
        // Predicated region
        $region33: #{tpu_custom_call.1} parent=31 // pred_check
          %p164 = pneg %p41
        $region34: #{tpu_custom_call.1} parent=31 // pred_check_branch
          %166 = sbr.rel (%p164) target = $region36
        $region35: #{tpu_custom_call.1} parent=31 // pred_region
          %167 = dma.done %s160, 128
        $region36: #{tpu_custom_call.1} parent=31 // pred_fallthru
          _
        %s168 = sand.u32 %s28, 1
        %s169 = scalar_lea.sflag [#allocation3], %s168
        %s170 = sand.u32 %s28, 1
        %s171 = smul.addr %s170, 8
        %s172 = scalar_lea.vmem [#allocation2], %s171
        %p173 = pneg %p41
        %p174 = pneg %p38
        %p175 = pneg %p62
        %p176 = pneg %p59
        %p177 = pneg %p83
        %p178 = pneg %p80
        %p179 = pneg %p109
        %p180 = pneg %p106
        %s181 = sand.u32 %s96, 1
        %s182 = scalar_lea.sflag [#allocation4], %s181
        %s183 = sand.u32 %s96, 1
        %s184 = smul.addr %s183, 8
        %s185 = scalar_lea.vmem [#allocation5], %s184
        %v186 = vld [vmem:[%s163] sm:$0xff]
        %v187 = vlaneseq
        %v188 = vand.u32 %v187, 127
        %vm189 = vcmp.lt.s32.totalorder %v188, 32
        %v190 = vsel %vm189, %v186, 0.0
        %191 = vadd.xlane.f32.xlu0 %v190
        %v192 = vpop.xlane.xlu0 %191
        %v193 = vmul.f32 %v192, 0.03125
        %v194 = vsub.f32 %v190, %v193
        %v195 = vsel %vm189, %v194, 0.0
        %v196 = vmul.f32 %v195, %v195
        %197 = vadd.xlane.f32.xlu0 %v196
        %v198 = vpop.xlane.xlu0 %197
        %v199 = vmul.f32 %v198, 0.03125
        %v200 = vadd.f32 %v199, 1e-05
        %v201 = vrsqrt.pop %v200
        %v202 = vmul.f32 %v195, %v201
        %v203 = vld [vmem:[%s1] sm:$0x1]
        %v205 = vlaneseq
        %v206 = vshrl.u32 %v205, 7
        %v207 = vsub.s32 0, %v206
        %v208 = vrot.slane %v203, %v207
        %v210 = vmul.f32 %v208, %v202
        %v211 = vld [vmem:[%s2] sm:$0x1]
        %v213 = vlaneseq
        %v214 = vshrl.u32 %v213, 7
        %v215 = vsub.s32 0, %v214
        %v216 = vrot.slane %v211, %v215
        %v218 = vadd.f32 %v210, %v216
        %219 = vst [vmem:[%s185] sm:$0xff] %v218
        %s220 = sand.u32 %s96, 1
        %s221 = scalar_lea.sflag [#allocation4], %s220
        %s222 = sand.u32 %s96, 1
        %s223 = smul.addr %s222, 8
        %s224 = scalar_lea.vmem [#allocation5], %s223
        // Predicated region
        $region37: #{tpu_custom_call.1} parent=31 // pred_check
          %p225 = pneg %p106
        $region38: #{tpu_custom_call.1} parent=31 // pred_check_branch
          %227 = sbr.rel (%p225) target = $region40
        $region39: #{tpu_custom_call.1} parent=31 // pred_region
          %s229 = ssub.s32 128, 128
          %230 = vsyncadd %s221, %s229
          %s231 = smul.addr %s20, 128
          %s232 = scalar_lea.hbm %s3, %s231
          %s234 = sshll.u32 %s224, 4
          %s235 = int_to_ptr.vmem [resolvable:$true] %s234
          %237 = dma.vmem_to_hbm [thread:$0]  %s235, 128, %s232, %s221
        $region40: #{tpu_custom_call.1} parent=31 // pred_fallthru
          _
      $region32: #{tpu_custom_call.1} parent=5 // pred_fallthru
        _
      %p238 = scmp.le.s32.totalorder 2, %s15
      // Predicated region
      $region41: #{tpu_custom_call.1} parent=5 // pred_check
        %p239 = pneg %p238
      $region42: #{tpu_custom_call.1} parent=5 // pred_check_branch
        %241 = sbr.rel (%p239) target = $region44
      $region43: #{tpu_custom_call.1} parent=5 // pred_region
        %s242 = ssub.s32 %s15, 2
        // Predicated region
        $region45: #{tpu_custom_call.1} parent=43 // pred_check
          %p243 = pneg %p112
        $region46: #{tpu_custom_call.1} parent=43 // pred_check_branch
          %245 = sbr.rel (%p243) target = $region48
        $region47: #{tpu_custom_call.1} parent=43 // pred_region
          %s246 = sand.u32 %s97, 1
          %s247 = scalar_lea.sflag [#allocation4], %s246
          %s248 = sand.u32 %s97, 1
          %s249 = smul.addr %s248, 8
          %s250 = scalar_lea.vmem [#allocation5], %s249
          %251 = dma.done %s247, 128
        $region48: #{tpu_custom_call.1} parent=43 // pred_fallthru
          _
      $region44: #{tpu_custom_call.1} parent=5 // pred_fallthru
        _
    $region6: #{tpu_custom_call.1} parent=1 // loop_footer
      %s19 = sadd.s32 1, %s15
    $region7: #{tpu_custom_call.1} parent=1 // loop_footer_branch
      %14 = sbr.rel target = $region3
    $region8: #{tpu_custom_call.1} parent=1 // loop_exit
      _
    %252 = vsyncpa [#allocation3], 1
    %s253 = scalar_lea.sflag [#allocation3], 1
    %254 = vsyncpa %s253, 1
    %255 = vsyncpa [#allocation4], 1
    %s256 = scalar_lea.sflag [#allocation4], 1
    %257 = vsyncpa %s256, 1

</llo_original>
